<compile_context>
chip_gen: v7x
topology: tpu7x:2x2x1
jax: 0.10.0
libtpu: 0.0.40
codegen_flags: <defaults>
</compile_context>

<pallas_src>
import functools
import math

import jax
import jax.numpy as jnp
import numpy as np
from jax.experimental import pallas as pl
from jax.experimental.pallas import tpu as pltpu


def _unfold2d(x, k, s):
    """PyTorch nn.Unfold semantics for a single-channel NCHW input.

    x: (N, 1, H, W) -> (N, k*k, L) with patch dim ordered (kh, kw) and
    windows ordered row-major over (oh, ow).
    """
    N, _, H, W = x.shape
    oh = (H - k) // s + 1
    ow = (W - k) // s + 1
    ih = jnp.arange(oh)[:, None] * s + jnp.arange(k)[None, :]        # (oh, k)
    iw = jnp.arange(ow)[:, None] * s + jnp.arange(k)[None, :]        # (ow, k)
    g = x[:, 0]                                                      # (N, H, W)
    patches = g[:, ih[:, :, None, None], iw[None, None, :, :]]       # (N, oh, kh, ow, kw)
    patches = jnp.transpose(patches, (0, 2, 4, 1, 3))                # (N, kh, kw, oh, ow)
    return patches.reshape(N, k * k, oh * ow)


def _kd_kernel(lab_ref, p_ref, out_ref, acc_ref, *, tau, num_class, k2):
    """One (row-block, channel) grid step of the GT-KD loss.

    lab_ref: (TL, K2) int32   unfolded gt-label patches (shared across channels).
    p_ref:   (TL, K2) student logits patches for channel ci (squeezed leading dim).
    out_ref: (8, K2) f32      per-row-block partial (scalar splatted; wrapper reads [0,0]).
    acc_ref: (TL, K2) f32     VMEM accumulator, resident across the channel axis.
    """
    ci = pl.program_id(1)
    n_ch = pl.num_programs(1)

    v = float(num_class) / float(tau)          # teacher "hit" logit after /tau
    c0 = math.exp(-v)                          # exp(-v), always <= 1 (stable)
    one_m_c0 = 1.0 - c0

    # ---- teacher, analytically from the binary mask -------------------------
    # Per row: t_j = v if label_j == ci else 0.  With m = #hits:
    #   Z' = exp(-v) * sum_j exp(t_j) = m + (K2 - m) * exp(-v)
    #   softmax_j     = (c0 + mask_j * (1 - c0)) / Z'
    #   log_softmax_j = mask_j * v - (v + log Z')
    mask = (lab_ref[...] == ci).astype(jnp.float32)              # (TL, K2)
    m = jnp.sum(mask, axis=-1, keepdims=True)                    # (TL, 1)
    z = m * one_m_c0 + float(k2) * c0                            # (TL, 1)
    inv_z = pl.reciprocal(z, approx=False)                       # per-row only: keep exact
    log_z = jnp.log(z)
    sm_t = (mask * one_m_c0 + c0) * inv_z                        # (TL, K2)
    lsm_t = mask * v - (log_z + v)                               # (TL, K2)

    # ---- student log-softmax -------------------------------------------------
    s = p_ref[...].astype(jnp.float32)
    if float(tau) != 1.0:
        s = s * (1.0 / float(tau))
    s_max = jnp.max(s, axis=-1, keepdims=True)
    s_sh = s - s_max
    s_sum = jnp.sum(jnp.exp(s_sh), axis=-1, keepdims=True)
    lsm_s = s_sh - jnp.log(s_sum)

    partial = sm_t * (lsm_t - lsm_s)                             # (TL, K2)

    @pl.when(ci == 0)
    def _():
        acc_ref[...] = partial

    @pl.when(ci > 0)
    def _():
        acc_ref[...] += partial

    @pl.when(ci == n_ch - 1)
    def _():
        total = jnp.sum(acc_ref[...])
        out_ref[...] = jnp.broadcast_to(total, out_ref.shape)


def slide_gtkd_loss(pred, target_labels, *, tau=1.0, kernelsize=8, stride=8,
                    loss_weight=1.0, num_class=9, row_tile=1024):
    """JAX/Pallas forward of SlideGTKDLoss.

    pred: (b, c, h, w) float logits (NCHW, as in the PyTorch module).
    target_labels: (b, h, w) int gt labels in [0, c).
    """
    b, c, h, w = pred.shape
    k2 = kernelsize * kernelsize

    # Student windows: keep pred's native dtype; the kernel upcasts to f32.
    pred_r = pred.reshape(b * c, 1, h, w)
    p_patch = _unfold2d(pred_r, kernelsize, stride)                  # (b*c, K2, L)
    L = p_patch.shape[-1]
    p_rows = jnp.transpose(p_patch, (0, 2, 1))                       # (b*c, L, K2)
    p_rows = p_rows.reshape(b, c, L, k2).transpose(1, 0, 2, 3)       # (c, b, L, K2)
    p_rows = p_rows.reshape(c, b * L, k2)                            # (c, RL, K2)

    # Label windows: shared across the c channel planes -> only (RL, K2) int32 in HBM.
    lab_r = target_labels.astype(jnp.int32).reshape(b, 1, h, w)
    l_patch = _unfold2d(lab_r, kernelsize, stride)                   # (b, K2, L)
    l_rows = jnp.transpose(l_patch, (0, 2, 1)).reshape(b * L, k2)    # (RL, K2)

    RL = b * L
    tl = min(int(row_tile), ((RL + 7) // 8) * 8)
    tl = max(8, (tl // 8) * 8)
    RLp = ((RL + tl - 1) // tl) * tl
    if RLp != RL:
        # Zero-padded rows give identical uniform teacher/student distributions
        # for every channel -> their KL contribution is exactly 0.
        p_rows = jnp.pad(p_rows, ((0, 0), (0, RLp - RL), (0, 0)))
        l_rows = jnp.pad(l_rows, ((0, RLp - RL), (0, 0)))

    n_blocks = RLp // tl
    kernel = functools.partial(_kd_kernel, tau=float(tau),
                               num_class=float(num_class), k2=k2)

    partials = pl.pallas_call(
        kernel,
        out_shape=jax.ShapeDtypeStruct((n_blocks, 8, k2), jnp.float32),
        grid_spec=pltpu.PrefetchScalarGridSpec(
            num_scalar_prefetch=0,
            grid=(n_blocks, c),            # channel (reduction) axis is innermost
            in_specs=[
                # label block: independent of ci -> stays resident across the channel loop
                pl.BlockSpec((tl, k2), lambda ri, ci: (ri, 0)),
                # student block: one channel plane slice per step (leading dim squeezed)
                pl.BlockSpec((None, tl, k2), lambda ri, ci: (ci, ri, 0)),
            ],
            out_specs=pl.BlockSpec((None, 8, k2), lambda ri, ci: (ri, 0, 0)),
            scratch_shapes=[pltpu.VMEM((tl, k2), jnp.float32)],
        ),
        compiler_params=pltpu.CompilerParams(
            dimension_semantics=("parallel", "arbitrary")),
    )(l_rows, p_rows)

    loss = jnp.sum(partials[:, 0, 0]) * (float(tau) ** 2)
    return loss_weight * loss / (b * c)


def slide_gtkd_loss_ref(pred, target_labels, *, tau=1.0, kernelsize=8, stride=8,
                        loss_weight=1.0, num_class=9):
    """Pure-JAX reference mirroring the PyTorch forward exactly."""
    b, c, h, w = pred.shape
    gt_mask = (jnp.arange(c)[None, :, None, None] ==
               target_labels[:, None, :, :].astype(jnp.int32))
    pred_r = pred.reshape(b * c, 1, h, w).astype(jnp.float32)
    tgt_r = gt_mask.reshape(b * c, 1, h, w).astype(jnp.float32) * float(num_class)
    p_u = _unfold2d(pred_r, kernelsize, stride)   # (N, K2, L)
    t_u = _unfold2d(tgt_r, kernelsize, stride)
    sm_t = jax.nn.softmax(t_u / tau, axis=1)
    lsm_t = jax.nn.log_softmax(t_u / tau, axis=1)
    lsm_p = jax.nn.log_softmax(p_u / tau, axis=1)
    loss = jnp.sum(sm_t * lsm_t - sm_t * lsm_p) * (tau ** 2)
    return loss_weight * loss / (b * c)


if __name__ == "__main__":
    # SlideGTKDLoss defaults: tau=1.0, kernelsize=8, stride=8, loss_weight=1.0, num_class=9
    b, c, h, w = 2, 4, 16, 16
    key = jax.random.PRNGKey(0)
    k_pred, k_tgt = jax.random.split(key)
    pred = jax.random.normal(k_pred, (b, c, h, w), dtype=jnp.float32)
    target = jax.random.randint(k_tgt, (b, h, w), 0, c, dtype=jnp.int32)

    loss = jax.block_until_ready(
        slide_gtkd_loss(pred, target, tau=1.0, kernelsize=8, stride=8,
                        loss_weight=1.0, num_class=9))
    loss_ref = jax.block_until_ready(
        slide_gtkd_loss_ref(pred, target, tau=1.0, kernelsize=8, stride=8,
                            loss_weight=1.0, num_class=9))
    np.testing.assert_allclose(np.asarray(loss), np.asarray(loss_ref),
                               rtol=1e-4, atol=1e-5)

    # Second (still small) config exercising row padding, multiple row blocks and
    # the parallel row-block grid axis.
    b2, c2, h2, w2 = 2, 4, 40, 40
    k_p2, k_t2 = jax.random.split(jax.random.PRNGKey(1))
    pred2 = jax.random.normal(k_p2, (b2, c2, h2, w2), dtype=jnp.float32)
    target2 = jax.random.randint(k_t2, (b2, h2, w2), 0, c2, dtype=jnp.int32)
    loss2 = jax.block_until_ready(
        slide_gtkd_loss(pred2, target2, tau=1.0, kernelsize=8, stride=8,
                        loss_weight=1.0, num_class=9, row_tile=16))
    loss2_ref = jax.block_until_ready(
        slide_gtkd_loss_ref(pred2, target2, tau=1.0, kernelsize=8, stride=8,
                            loss_weight=1.0, num_class=9))
    np.testing.assert_allclose(np.asarray(loss2), np.asarray(loss2_ref),
                               rtol=1e-4, atol=1e-5)

    print("KERNEL_OK")
</pallas_src>

<mosaic_0001>
module attributes {stable_mosaic.version = 11 : i64} {
  func.func @_kd_kernel(%arg0: i32, %arg1: i32, %arg2: memref<8x64xi32, #tpu.memory_space<vmem>>, %arg3: memref<1x8x64xf32, #tpu.memory_space<vmem>>, %arg4: memref<1x8x64xf32, #tpu.memory_space<vmem>>, %arg5: memref<8x64xf32, #tpu.memory_space<vmem>>) attributes {dimension_semantics = [#tpu.dimension_semantics<parallel>, #tpu.dimension_semantics<arbitrary>], iteration_bounds = array<i64: 1, 4>, scalar_prefetch = 0 : i64, scratch_operands = 1 : i64, tpu.core_type = #tpu.core_type<tc>, window_params = [{transform_indices = @transform_0, window_bounds = array<i64: 8, 64>}, {transform_indices = @transform_1, window_bounds = array<i64: 1, 8, 64>}, {transform_indices = @transform_2, window_bounds = array<i64: 1, 8, 64>}]} {
    %c0 = arith.constant 0 : index
    %c0_0 = arith.constant 0 : index
    %0 = vector.load %arg2[%c0, %c0_0] : memref<8x64xi32, #tpu.memory_space<vmem>>, vector<8x64xi32>
    %1 = vector.broadcast %arg1 : i32 to vector<8x64xi32>
    %2 = arith.cmpi eq, %0, %1 : vector<8x64xi32>
    %3 = arith.extui %2 : vector<8x64xi1> to vector<8x64xi32>
    %4 = arith.sitofp %3 : vector<8x64xi32> to vector<8x64xf32>
    %cst = arith.constant dense<0.000000e+00> : vector<8xf32>
    %5 = vector.multi_reduction <add>, %4, %cst [1] : vector<8x64xf32> to vector<8xf32>
    %6 = vector.shape_cast %5 : vector<8xf32> to vector<8x1xf32>
    %cst_1 = arith.constant 0.999876618 : f32
    %7 = vector.broadcast %cst_1 : f32 to vector<8x1xf32>
    %8 = arith.mulf %6, %7 : vector<8x1xf32>
    %cst_2 = arith.constant 0.00789822731 : f32
    %9 = vector.broadcast %cst_2 : f32 to vector<8x1xf32>
    %10 = arith.addf %8, %9 : vector<8x1xf32>
    %11 = tpu.reciprocal %10 : vector<8x1xf32> -> vector<8x1xf32>
    %12 = math.log %10 : vector<8x1xf32>
    %cst_3 = arith.constant 0.999876618 : f32
    %13 = vector.broadcast %cst_3 : f32 to vector<8x64xf32>
    %14 = arith.mulf %4, %13 : vector<8x64xf32>
    %cst_4 = arith.constant 1.23409802E-4 : f32
    %15 = vector.broadcast %cst_4 : f32 to vector<8x64xf32>
    %16 = arith.addf %14, %15 : vector<8x64xf32>
    %17 = vector.broadcast %11 : vector<8x1xf32> to vector<8x64xf32>
    %18 = arith.mulf %16, %17 : vector<8x64xf32>
    %cst_5 = arith.constant 9.000000e+00 : f32
    %19 = vector.broadcast %cst_5 : f32 to vector<8x64xf32>
    %20 = arith.mulf %4, %19 : vector<8x64xf32>
    %cst_6 = arith.constant 9.000000e+00 : f32
    %21 = vector.broadcast %cst_6 : f32 to vector<8x1xf32>
    %22 = arith.addf %12, %21 : vector<8x1xf32>
    %23 = vector.broadcast %22 : vector<8x1xf32> to vector<8x64xf32>
    %24 = arith.subf %20, %23 : vector<8x64xf32>
    %c0_7 = arith.constant 0 : index
    %c0_8 = arith.constant 0 : index
    %c0_9 = arith.constant 0 : index
    %25 = vector.load %arg3[%c0_7, %c0_8, %c0_9] : memref<1x8x64xf32, #tpu.memory_space<vmem>>, vector<1x8x64xf32>
    %26 = vector.shape_cast %25 : vector<1x8x64xf32> to vector<8x64xf32>
    %cst_10 = arith.constant dense<0xFF800000> : vector<8xf32>
    %27 = vector.multi_reduction <maximumf>, %26, %cst_10 [1] : vector<8x64xf32> to vector<8xf32>
    %28 = vector.shape_cast %27 : vector<8xf32> to vector<8x1xf32>
    %29 = vector.broadcast %28 : vector<8x1xf32> to vector<8x64xf32>
    %30 = arith.subf %26, %29 : vector<8x64xf32>
    %31 = math.exp %30 : vector<8x64xf32>
    %cst_11 = arith.constant dense<0.000000e+00> : vector<8xf32>
    %32 = vector.multi_reduction <add>, %31, %cst_11 [1] : vector<8x64xf32> to vector<8xf32>
    %33 = vector.shape_cast %32 : vector<8xf32> to vector<8x1xf32>
    %34 = math.log %33 : vector<8x1xf32>
    %35 = vector.broadcast %34 : vector<8x1xf32> to vector<8x64xf32>
    %36 = arith.subf %30, %35 : vector<8x64xf32>
    %37 = arith.subf %24, %36 : vector<8x64xf32>
    %38 = arith.mulf %18, %37 : vector<8x64xf32>
    %c0_i32 = arith.constant 0 : i32
    %39 = arith.cmpi eq, %arg1, %c0_i32 : i32
    %40 = arith.extui %39 : i1 to i32
    %c0_i32_12 = arith.constant 0 : i32
    %41 = arith.cmpi ne, %40, %c0_i32_12 : i32
    scf.if %41 {
      %c0_16 = arith.constant 0 : index
      %c0_17 = arith.constant 0 : index
      %48 = vector.load %arg5[%c0_16, %c0_17] : memref<8x64xf32, #tpu.memory_space<vmem>>, vector<8x64xf32>
      tpu.vector_store %arg5[%c0_16, %c0_17], %38 {strides = array<i32>} : memref<8x64xf32, #tpu.memory_space<vmem>>, vector<8x64xf32>,
    } else {
    }
    %c0_i32_13 = arith.constant 0 : i32
    %42 = arith.cmpi sgt, %arg1, %c0_i32_13 : i32
    %43 = arith.extui %42 : i1 to i32
    %c0_i32_14 = arith.constant 0 : i32
    %44 = arith.cmpi ne, %43, %c0_i32_14 : i32
    scf.if %44 {
      %c0_16 = arith.constant 0 : index
      %c0_17 = arith.constant 0 : index
      %48 = vector.load %arg5[%c0_16, %c0_17] : memref<8x64xf32, #tpu.memory_space<vmem>>, vector<8x64xf32>
      %49 = arith.addf %48, %38 : vector<8x64xf32>
      %c0_18 = arith.constant 0 : index
      %c0_19 = arith.constant 0 : index
      %50 = vector.load %arg5[%c0_18, %c0_19] : memref<8x64xf32, #tpu.memory_space<vmem>>, vector<8x64xf32>
      tpu.vector_store %arg5[%c0_18, %c0_19], %49 {strides = array<i32>} : memref<8x64xf32, #tpu.memory_space<vmem>>, vector<8x64xf32>,
    } else {
    }
    %c3_i32 = arith.constant 3 : i32
    %45 = arith.cmpi eq, %arg1, %c3_i32 : i32
    %46 = arith.extui %45 : i1 to i32
    %c0_i32_15 = arith.constant 0 : i32
    %47 = arith.cmpi ne, %46, %c0_i32_15 : i32
    scf.if %47 {
      %c0_16 = arith.constant 0 : index
      %c0_17 = arith.constant 0 : index
      %48 = vector.load %arg5[%c0_16, %c0_17] : memref<8x64xf32, #tpu.memory_space<vmem>>, vector<8x64xf32>
      %49 = vector.shape_cast %48 : vector<8x64xf32> to vector<1x8x64xf32>
      %cst_18 = arith.constant dense<0.000000e+00> : vector<1xf32>
      %50 = vector.multi_reduction <add>, %49, %cst_18 [1, 2] : vector<1x8x64xf32> to vector<1xf32>
      %51 = vector.shape_cast %50 : vector<1xf32> to vector<1x1x1xf32>
      %52 = vector.extract %51[0, 0, 0] : f32 from vector<1x1x1xf32>
      %53 = vector.broadcast %52 : f32 to vector<8x64xf32>
      %c0_19 = arith.constant 0 : index
      %c0_20 = arith.constant 0 : index
      %c0_21 = arith.constant 0 : index
      %54 = vector.load %arg4[%c0_19, %c0_20, %c0_21] : memref<1x8x64xf32, #tpu.memory_space<vmem>>, vector<1x8x64xf32>
      %55 = vector.shape_cast %54 : vector<1x8x64xf32> to vector<8x64xf32>
      %56 = vector.shape_cast %53 : vector<8x64xf32> to vector<1x8x64xf32>
      tpu.vector_store %arg4[%c0_19, %c0_20, %c0_21], %56 {strides = array<i32>} : memref<1x8x64xf32, #tpu.memory_space<vmem>>, vector<1x8x64xf32>,
    } else {
    }
    return
  }
  func.func @transform_0(%arg0: i32, %arg1: i32) -> (i32, i32) {
    %c0_i32 = arith.constant 0 : i32
    %c0_i32_0 = arith.constant 0 : i32
    return %arg0, %c0_i32 : i32, i32
  }
  func.func @transform_1(%arg0: i32, %arg1: i32) -> (i32, i32, i32) {
    %c0_i32 = arith.constant 0 : i32
    %c0_i32_0 = arith.constant 0 : i32
    return %arg1, %arg0, %c0_i32 : i32, i32, i32
  }
  func.func @transform_2(%arg0: i32, %arg1: i32) -> (i32, i32, i32) {
    %c0_i32 = arith.constant 0 : i32
    %c0_i32_0 = arith.constant 0 : i32
    %c0_i32_1 = arith.constant 0 : i32
    return %arg0, %c0_i32, %c0_i32_0 : i32, i32, i32
  }
}

</mosaic_0001>

<llo_original>
// kernel: tpu_custom_call.1
$region0: #{tpu_custom_call.1}
  #allocation0 [shape = 'u32[]', space=smem, size = 0x4, offset = 0x4, fixed_abs, tag = 'smem constant byte address 0x4 - core index']
  #allocation1 [shape = 'u32[144,128]{1,0:T(1,128)}', space=vmem, size = 0x12000, scoped, tag = 'internal scratch']
  #allocation2 [shape = 'f32[8,64]{1,0:T(8,128)}', space=vmem, size = 0x1000, scoped, tag = 'scratch operand']
  %s0 = inlined_call_operand.hbm [shape: s32[8,64], index: 0, kind: input, shape index: {}]
  %s1 = inlined_call_operand.hbm [shape: f32[4,8,64], index: 1, kind: input, shape index: {}]
  %s2 = inlined_call_operand.hbm [shape: f32[1,8,64], index: 2, kind: output, shape index: {}]
  %s3 = sld [smem:[#allocation0]]
  $region61: #{tpu_custom_call.1} parent=0
    _
  %s5 = ssub.s32 1, %s3
  %s6 = scalar_select 0, %s5, %s3
  $region1: #{tpu_custom_call.1} parent=0
    #allocation3 [shape = 'u8[4096]{0}', space=vmem, size = 0x1000, scoped, tag = 'input window, operand 0, single buffered']
    #allocation4 [shape = 's32[2]{0}', space=sflag, size = 0x8, scoped, tag = 'scoped memory for tpu_custom_call.1']
    #allocation5 [shape = 's32[2]{0}', space=sflag, size = 0x8, scoped, tag = 'scoped memory for tpu_custom_call.1']
    #allocation6 [shape = 'u8[8192]{0}', space=vmem, size = 0x2000, scoped, tag = 'input window, operand 1']
    #allocation7 [shape = 's32[2]{0}', space=sflag, size = 0x8, scoped, tag = 'scoped memory for tpu_custom_call.1']
    #allocation8 [shape = 'u8[4096]{0}', space=vmem, size = 0x1000, scoped, tag = 'output window, operand 0, single buffered']
    %7 = vsyncpa [#allocation4], 0
    %8 = vsyncpa [#allocation7], 0
    %s9 = scalar_lea.sflag [#allocation7], 1
    %10 = vsyncpa %s9, 0
    %11 = vsyncpa [#allocation5], 0
    loop: start=0, step=1, limit=6
    $region2: #{tpu_custom_call.1} parent=1 // loop_pre_header
      _
    $region3: #{tpu_custom_call.1} parent=1 // loop_header
      %s13 = sphi 0, %s17
      %p14 = scmp.ge.s32.totalorder %s13, 6
      %s20 = sphi 0, %s32
      %s21 = sphi 0, %s28
      %s22 = sphi 0, %s20
      %s23 = sphi 0, %s21
      %s24 = sphi 0, %s22
      %s25 = sphi 0, %s23
      %s35 = sphi 0, %s37
      %s38 = sphi 0, %s35
      %s39 = sphi 0, %s38
      %s55 = sphi 0, %s39
      %s63 = sphi 0, %s65
      %s66 = sphi 0, %s63
      %s67 = sphi 0, %s66
      %s83 = sphi 0, %s67
      %s89 = sphi 0, %s91
      %s92 = sphi 0, %s89
      %s93 = sphi 0, %s92
      %s109 = sphi 0, %s93
    $region4: #{tpu_custom_call.1} parent=1 // loop_header_branch
      %16 = sbr.rel (%p14) target = $region8
    $region5: #{tpu_custom_call.1} parent=1 // loop_body
      %s18 = ssub.s32 %s13, 1
      %s19 = ssub.s32 %s13, 2
      %s26 = sadd.s32 1, %s21
      %p27 = scmp.ge.s32.totalorder %s26, 4
      %s28 = scalar_select %p27, 0, %s26
      %s29 = sadd.s32 1, %s20
      %s30 = scalar_select %p27, %s29, %s20
      %p31 = scmp.ge.s32.totalorder %s30, 1
      %s32 = scalar_select %p31, 0, %s30
      %s33 = ssub.s32 %s20, %s32
      %p34 = scmp.eq.s32.totalorder %s33, 0
      %s36 = sadd.s32 %s35, 1
      %s37 = scalar_select %p34, %s35, %s36
      %p40 = pneg %p34
      %p41 = scmp.eq.s32.totalorder %s13, 3
      %p42 = por %p40, %p41
      %p43 = scmp.ne.s32.totalorder %s35, %s38
      %p44 = scmp.eq.s32.totalorder %s13, 0
      %p45 = por %p43, %p44
      %p46 = scmp.ne.s32.totalorder %s35, %s38
      %p47 = scmp.eq.s32.totalorder %s18, 3
      %p48 = por %p46, %p47
      %p49 = scmp.ne.s32.totalorder %s38, %s39
      %p50 = scmp.eq.s32.totalorder %s18, 0
      %p51 = por %p49, %p50
      %p52 = scmp.ne.s32.totalorder %s38, %s39
      %p53 = scmp.eq.s32.totalorder %s19, 3
      %p54 = por %p52, %p53
      %p56 = scmp.ne.s32.totalorder %s39, %s55
      %p57 = scmp.eq.s32.totalorder %s19, 0
      %p58 = por %p56, %p57
      %s59 = ssub.s32 %s21, %s28
      %s60 = ssub.s32 %s20, %s32
      %s61 = sor.u32 %s59, %s60
      %p62 = scmp.eq.s32.totalorder %s61, 0
      %s64 = sadd.s32 %s63, 1
      %s65 = scalar_select %p62, %s63, %s64
      %p68 = pneg %p62
      %p69 = scmp.eq.s32.totalorder %s13, 3
      %p70 = por %p68, %p69
      %p71 = scmp.ne.s32.totalorder %s63, %s66
      %p72 = scmp.eq.s32.totalorder %s13, 0
      %p73 = por %p71, %p72
      %p74 = scmp.ne.s32.totalorder %s63, %s66
      %p75 = scmp.eq.s32.totalorder %s18, 3
      %p76 = por %p74, %p75
      %p77 = scmp.ne.s32.totalorder %s66, %s67
      %p78 = scmp.eq.s32.totalorder %s18, 0
      %p79 = por %p77, %p78
      %p80 = scmp.ne.s32.totalorder %s66, %s67
      %p81 = scmp.eq.s32.totalorder %s19, 3
      %p82 = por %p80, %p81
      %p84 = scmp.ne.s32.totalorder %s67, %s83
      %p85 = scmp.eq.s32.totalorder %s19, 0
      %p86 = por %p84, %p85
      %s87 = ssub.s32 %s20, %s32
      %p88 = scmp.eq.s32.totalorder %s87, 0
      %s90 = sadd.s32 %s89, 1
      %s91 = scalar_select %p88, %s89, %s90
      %p94 = pneg %p88
      %p95 = scmp.eq.s32.totalorder %s13, 3
      %p96 = por %p94, %p95
      %p97 = scmp.ne.s32.totalorder %s89, %s92
      %p98 = scmp.eq.s32.totalorder %s13, 0
      %p99 = por %p97, %p98
      %p100 = scmp.ne.s32.totalorder %s89, %s92
      %p101 = scmp.eq.s32.totalorder %s18, 3
      %p102 = por %p100, %p101
      %p103 = scmp.ne.s32.totalorder %s92, %s93
      %p104 = scmp.eq.s32.totalorder %s18, 0
      %p105 = por %p103, %p104
      %p106 = scmp.ne.s32.totalorder %s92, %s93
      %p107 = scmp.eq.s32.totalorder %s19, 3
      %p108 = por %p106, %p107
      %p110 = scmp.ne.s32.totalorder %s93, %s109
      %p111 = scmp.eq.s32.totalorder %s19, 0
      %p112 = por %p110, %p111
      %p113 = scmp.le.s32.totalorder 1, %s13
      %p114 = scmp.lt.s32.totalorder %s13, 5
      %p115 = pnand %p113, %p114
      %p116 = pneg %p115
      // Predicated region
      $region9: #{tpu_custom_call.1} parent=5 // pred_check
        _
      $region10: #{tpu_custom_call.1} parent=5 // pred_check_branch
        %118 = sbr.rel (%p115) target = $region12
      $region11: #{tpu_custom_call.1} parent=5 // pred_region
        %s119 = ssub.s32 %s13, 1
        // Predicated region
        $region13: #{tpu_custom_call.1} parent=11 // pred_check
          %p120 = pneg %p51
        $region14: #{tpu_custom_call.1} parent=11 // pred_check_branch
          %122 = sbr.rel (%p120) target = $region16
        $region15: #{tpu_custom_call.1} parent=11 // pred_region
          %s124 = ssub.s32 128, 128
          %125 = vsyncadd [#allocation4], %s124
          %s126 = smul.addr %s22, 128
          %s127 = scalar_lea.hbm %s0, %s126
          %s129 = sshll.u32 [#allocation3], 4
          %s130 = int_to_ptr.vmem [resolvable:$true] %s129
          %132 = dma.hbm_to_vmem [thread:$0]  %s127, 128, %s130, [#allocation4]
        $region16: #{tpu_custom_call.1} parent=11 // pred_fallthru
          _
      $region12: #{tpu_custom_call.1} parent=5 // pred_fallthru
        _
      %p133 = scmp.lt.s32.totalorder %s13, 4
      // Predicated region
      $region17: #{tpu_custom_call.1} parent=5 // pred_check
        %p134 = pneg %p133
      $region18: #{tpu_custom_call.1} parent=5 // pred_check_branch
        %136 = sbr.rel (%p134) target = $region20
      $region19: #{tpu_custom_call.1} parent=5 // pred_region
        // Predicated region
        $region21: #{tpu_custom_call.1} parent=19 // pred_check
          %p137 = pneg %p73
        $region22: #{tpu_custom_call.1} parent=19 // pred_check_branch
          %139 = sbr.rel (%p137) target = $region24
        $region23: #{tpu_custom_call.1} parent=19 // pred_region
          %s140 = sand.u32 %s63, 1
          %s141 = scalar_lea.sflag [#allocation7], %s140
          %s142 = sand.u32 %s63, 1
          %s143 = smul.addr %s142, 8
          %s144 = scalar_lea.vmem [#allocation6], %s143
          %s146 = ssub.s32 128, 128
          %147 = vsyncadd %s141, %s146
          %s148 = sadd.s32 %s20, %s21
          %s149 = smul.addr %s148, 128
          %s150 = scalar_lea.hbm %s1, %s149
          %s152 = sshll.u32 %s144, 4
          %s153 = int_to_ptr.vmem [resolvable:$true] %s152
          %155 = dma.hbm_to_vmem [thread:$0]  %s150, 128, %s153, %s141
        $region24: #{tpu_custom_call.1} parent=19 // pred_fallthru
          _
      $region20: #{tpu_custom_call.1} parent=5 // pred_fallthru
        _
      %p156 = scmp.le.s32.totalorder 1, %s13
      %p157 = scmp.lt.s32.totalorder %s13, 5
      %p158 = pnand %p156, %p157
      %p159 = pneg %p158
      // Predicated region
      $region25: #{tpu_custom_call.1} parent=5 // pred_check
        _
      $region26: #{tpu_custom_call.1} parent=5 // pred_check_branch
        %161 = sbr.rel (%p158) target = $region28
      $region27: #{tpu_custom_call.1} parent=5 // pred_region
        %s162 = ssub.s32 %s13, 1
        // Predicated region
        $region29: #{tpu_custom_call.1} parent=27 // pred_check
          %p163 = pneg %p51
        $region30: #{tpu_custom_call.1} parent=27 // pred_check_branch
          %165 = sbr.rel (%p163) target = $region32
        $region31: #{tpu_custom_call.1} parent=27 // pred_region
          %166 = dma.done [#allocation4], 128
        $region32: #{tpu_custom_call.1} parent=27 // pred_fallthru
          _
        %s167 = sand.u32 %s66, 1
        %s168 = scalar_lea.sflag [#allocation7], %s167
        %s169 = sand.u32 %s66, 1
        %s170 = smul.addr %s169, 8
        %s171 = scalar_lea.vmem [#allocation6], %s170
        // Predicated region
        $region33: #{tpu_custom_call.1} parent=27 // pred_check
          %p172 = pneg %p79
        $region34: #{tpu_custom_call.1} parent=27 // pred_check_branch
          %174 = sbr.rel (%p172) target = $region36
        $region35: #{tpu_custom_call.1} parent=27 // pred_region
          %175 = dma.done %s168, 128
        $region36: #{tpu_custom_call.1} parent=27 // pred_fallthru
          _
        %p176 = pneg %p51
        %p177 = pneg %p48
        %s178 = sand.u32 %s66, 1
        %s179 = scalar_lea.sflag [#allocation7], %s178
        %s180 = sand.u32 %s66, 1
        %s181 = smul.addr %s180, 8
        %s182 = scalar_lea.vmem [#allocation6], %s181
        %p183 = pneg %p79
        %p184 = pneg %p76
        %p185 = pneg %p105
        %p186 = pneg %p102
        %v187 = vld [vmem:[#allocation3] sm:$0xff]
        %v188 = vstv %s23
        %vm189 = vcmp.eq.s32.totalorder %v187, %v188
        %v190 = vsel %vm189, 1, 0
        %v191 = vcvt.s32.f32 %v190
        %vm192 = vcmask 523264
        %v193 = vsel %vm192, %v191, 0.0
        %194 = vadd.xlane.f32.xlu0 %v193
        %v195 = vpop.xlane.xlu0 %194
        %v196 = vmul.f32 %v195, 0.9998766
        %v197 = vadd.f32 %v196, 0.007898227
        %v198 = vrcp.pop %v197
        %v199 = vlog2.pop %v197
        %v200 = vmul.f32 %v199, 0.6931472
        %v201 = vmul.f32 %v191, 0.9998766
        %v202 = vadd.f32 %v201, 0.0001234098
        %v203 = vmul.f32 %v202, %v198
        %v204 = vmul.f32 %v191, 9.0
        %v205 = vadd.f32 %v200, 9.0
        %v206 = vsub.f32 %v204, %v205
        %v207 = vld [vmem:[%s171] sm:$0xff]
        %v208 = vsel %vm192, %v207, -inf
        %209 = vmax.xlane.f32.xlu0 %v208
        %v210 = vpop.xlane.xlu0 %209
        %v211 = vsub.f32 %v207, %v210
        %v212 = vmul.f32 %v211, 1.442695
        %v213 = vpow.pop %v212
        %v214 = vsel %vm192, %v213, 0.0
        %215 = vadd.xlane.f32.xlu0 %v214
        %v216 = vpop.xlane.xlu0 %215
        %v217 = vlog2.pop %v216
        %v218 = vmul.f32 %v217, 0.6931472
        %v219 = vsub.f32 %v211, %v218
        %v220 = vsub.f32 %v206, %v219
        %v221 = vmul.f32 %v203, %v220
        %p222 = scmp.eq.s32.totalorder %s23, 0
        // Predicated region
        $region37: #{tpu_custom_call.1} parent=27 // pred_check
          %p223 = pneg %p222
        $region38: #{tpu_custom_call.1} parent=27 // pred_check_branch
          %225 = sbr.rel (%p223) target = $region40
        $region39: #{tpu_custom_call.1} parent=27 // pred_region
          %226 = vst.msk [vmem:[#allocation2] sm:$0xff] %vm192, %v221
        $region40: #{tpu_custom_call.1} parent=27 // pred_fallthru
          _
        %p227 = scmp.gt.s32.totalorder %s23, 0
        // Predicated region
        $region41: #{tpu_custom_call.1} parent=27 // pred_check
          %p228 = pneg %p227
        $region42: #{tpu_custom_call.1} parent=27 // pred_check_branch
          %230 = sbr.rel (%p228) target = $region44
        $region43: #{tpu_custom_call.1} parent=27 // pred_region
          %v231 = vld [vmem:[#allocation2] sm:$0xff]
          %v232 = vadd.f32 %v231, %v221
          %233 = vst.msk [vmem:[#allocation2] sm:$0xff] %vm192, %v232
        $region44: #{tpu_custom_call.1} parent=27 // pred_fallthru
          _
        %p234 = scmp.eq.s32.totalorder %s23, 3
        // Predicated region
        $region45: #{tpu_custom_call.1} parent=27 // pred_check
          %p235 = pneg %p234
        $region46: #{tpu_custom_call.1} parent=27 // pred_check_branch
          %237 = sbr.rel (%p235) target = $region48
        $region47: #{tpu_custom_call.1} parent=27 // pred_region
          %v238 = vld [vmem:[#allocation2] sm:$0xff]
          %v239 = vsel %vm192, %v238, 0.0
          %240 = vadd.xlane.f32.xlu0 %v239
          %v241 = vpop.xlane.xlu0 %240
          %v242 = vrot.slane %v241, 4
          %v243 = vadd.f32 %v241, %v242
          %v244 = vrot.slane %v243, 2
          %v245 = vadd.f32 %v243, %v244
          %v246 = vrot.slane %v245, 1
          %v247 = vadd.f32 %v245, %v246
          %s248 = vtos %v247
          %v249 = vstv %s248
          %250 = vst.msk [vmem:[#allocation8] sm:$0xff] %vm192, %v249
        $region48: #{tpu_custom_call.1} parent=27 // pred_fallthru
          _
        // Predicated region
        $region49: #{tpu_custom_call.1} parent=27 // pred_check
          %p251 = pneg %p102
        $region50: #{tpu_custom_call.1} parent=27 // pred_check_branch
          %253 = sbr.rel (%p251) target = $region52
        $region51: #{tpu_custom_call.1} parent=27 // pred_region
          %s255 = ssub.s32 128, 128
          %256 = vsyncadd [#allocation5], %s255
          %s257 = smul.addr %s22, 128
          %s258 = scalar_lea.hbm %s2, %s257
          %s260 = sshll.u32 [#allocation8], 4
          %s261 = int_to_ptr.vmem [resolvable:$true] %s260
          %263 = dma.vmem_to_hbm [thread:$0]  %s261, 128, %s258, [#allocation5]
        $region52: #{tpu_custom_call.1} parent=27 // pred_fallthru
          _
        // Predicated region
        $region53: #{tpu_custom_call.1} parent=27 // pred_check
          %p264 = pneg %p102
        $region54: #{tpu_custom_call.1} parent=27 // pred_check_branch
          %266 = sbr.rel (%p264) target = $region56
        $region55: #{tpu_custom_call.1} parent=27 // pred_region
          %267 = dma.done [#allocation5], 128
        $region56: #{tpu_custom_call.1} parent=27 // pred_fallthru
          _
      $region28: #{tpu_custom_call.1} parent=5 // pred_fallthru
        _
      %p268 = scmp.le.s32.totalorder 2, %s13
      // Predicated region
      $region57: #{tpu_custom_call.1} parent=5 // pred_check
        %p269 = pneg %p268
      $region58: #{tpu_custom_call.1} parent=5 // pred_check_branch
        %271 = sbr.rel (%p269) target = $region60
      $region59: #{tpu_custom_call.1} parent=5 // pred_region
        %s272 = ssub.s32 %s13, 2
      $region60: #{tpu_custom_call.1} parent=5 // pred_fallthru
        _
    $region6: #{tpu_custom_call.1} parent=1 // loop_footer
      %s17 = sadd.s32 1, %s13
    $region7: #{tpu_custom_call.1} parent=1 // loop_footer_branch
      %12 = sbr.rel target = $region3
    $region8: #{tpu_custom_call.1} parent=1 // loop_exit
      _
    %273 = vsyncpa [#allocation4], 1
    %s274 = scalar_lea.sflag [#allocation4], 1
    %275 = vsyncpa %s274, 1
    %276 = vsyncpa [#allocation7], 1
    %s277 = scalar_lea.sflag [#allocation7], 1
    %278 = vsyncpa %s277, 1
    %279 = vsyncpa [#allocation5], 1
    %s280 = scalar_lea.sflag [#allocation5], 1
    %281 = vsyncpa %s280, 1

</llo_original>
